<compile_context>
chip_gen: v5e
topology: v5e:2x2
jax: 0.10.0
libtpu: 0.0.40
codegen_flags: <defaults>
</compile_context>

<pallas_src>
import math

import jax
import jax.numpy as jnp
from jax.experimental import pallas as pl
from jax.experimental.pallas import tpu as pltpu


# ----------------------------------------------------------------------------
# Pallas kernel: fused 'add' attention for one batch tile
# ----------------------------------------------------------------------------
def _attn_add_kernel(x_ref, wt_ref, wx_ref, bh_ref, wa_ref, v_ref, a_ref):
    x = x_ref[...]                                    # (bB, T, D) f32
    bB, T, D = x.shape
    H = wt_ref.shape[1]

    # q = x[:, -1, :] @ Wt  -> (bB, H)  (last-timestep rows already in VMEM)
    q = jnp.dot(x[:, T - 1, :], wt_ref[...],
                preferred_element_type=jnp.float32)

    # k = x @ Wx as ONE big MXU matmul: (bB*T, D) @ (D, H) -> (bB, T, H)
    k = jnp.dot(x.reshape(bB * T, D), wx_ref[...],
                preferred_element_type=jnp.float32).reshape(bB, T, H)

    # h = tanh(q + k + bh)  -> (bB, T, H)
    h = jnp.tanh(k + q[:, None, :] + bh_ref[...][None, :, :])

    # e = h @ Wa  -> (bB, T)   (Wa passed as (1, H) row; lane reduce)
    # (ba omitted: softmax(e + c) == softmax(e))
    e = jnp.sum(h * wa_ref[...][None, :, :], axis=-1)

    # softmax over the time axis (last axis)
    m = jnp.max(e, axis=-1, keepdims=True)
    p = jnp.exp(e - m)
    a = p * pl.reciprocal(jnp.sum(p, axis=-1, keepdims=True), approx=True)

    # v = a @ x as a weighted sublane reduce -> dense (bB, D)
    v = jnp.sum(a[:, :, None] * x, axis=1)

    v_ref[...] = v.astype(v_ref.dtype)
    a_ref[...] = a.astype(a_ref.dtype)


# ----------------------------------------------------------------------------
# Wrapper
# ----------------------------------------------------------------------------
_VMEM_LIMIT_BYTES = 48 * 1024 * 1024   # safe on v7x (64 MiB), generous on v5e/v6e


def _pick_block_b(B_pad, T, D, H, budget_bytes=32 * 1024 * 1024):
    """Largest batch tile that (a) divides B_pad and is a multiple of 8,
    (b) keeps the whole per-step VMEM plan (2x double-buffered x slab +
    k/h intermediates + outputs) under `budget_bytes`, and (c) when B_pad
    permits, leaves >= 2 grid steps so the parallel batch axis can shard
    across v7x's two TensorCores."""
    bytes_per_row = 4 * (2 * T * D + 2 * T * H + 2 * T + 2 * D)
    max_rows = max(8, budget_bytes // max(bytes_per_row, 1))
    cands = [c for c in range(8, B_pad + 1, 8)
             if B_pad % c == 0 and c <= max_rows]
    if not cands:
        return 8
    if B_pad >= 16:
        split = [c for c in cands if c < B_pad]
        if split:
            return max(split)
    return max(cands)


def single_attention_add(x, Wt, Wx, bh, Wa, ba=None, *, block_b=None):
    """x: (B, T, D) f32; Wt/Wx: (D, H); bh: (H,); Wa: (H, 1); ba: (1,) (ignored:
    softmax shift-invariant). Returns (v: (B, D), a: (B, T)) matching the
    PyTorch 'add' forward."""
    B, T, D = x.shape
    H = Wt.shape[1]

    # Pad the batch to a multiple of 8 (never a single unbounded block).
    B_pad = ((B + 7) // 8) * 8
    if B_pad != B:
        x_in = jnp.concatenate(
            [x, jnp.zeros((B_pad - B, T, D), x.dtype)], axis=0)
    else:
        x_in = x

    # Plain-JAX glue: 2-D-shaped small params for TPU refs.
    bh2 = bh.reshape(1, H)
    wa_row = Wa.reshape(1, H)                # Wa column -> row vector

    if block_b is None:
        block_b = _pick_block_b(B_pad, T, D, H)
    assert B_pad % block_b == 0, "padded batch must be divisible by the tile"
    grid = (B_pad // block_b,)

    v, a = pl.pallas_call(
        _attn_add_kernel,
        out_shape=(
            jax.ShapeDtypeStruct((B_pad, D), x.dtype),
            jax.ShapeDtypeStruct((B_pad, T), x.dtype),
        ),
        grid_spec=pltpu.PrefetchScalarGridSpec(
            num_scalar_prefetch=0,
            grid=grid,
            in_specs=[
                pl.BlockSpec((block_b, T, D), lambda b: (b, 0, 0)),   # x
                pl.BlockSpec((D, H), lambda b: (0, 0)),               # Wt (resident)
                pl.BlockSpec((D, H), lambda b: (0, 0)),               # Wx (resident)
                pl.BlockSpec((1, H), lambda b: (0, 0)),               # bh
                pl.BlockSpec((1, H), lambda b: (0, 0)),               # Wa row
            ],
            out_specs=(
                pl.BlockSpec((block_b, D), lambda b: (b, 0)),         # v
                pl.BlockSpec((block_b, T), lambda b: (b, 0)),         # a
            ),
        ),
        compiler_params=pltpu.CompilerParams(
            dimension_semantics=("parallel",),
            vmem_limit_bytes=_VMEM_LIMIT_BYTES,
        ),
    )(x_in, Wt, Wx, bh2, wa_row)

    return v[:B], a[:B]


# ----------------------------------------------------------------------------
# Pure-JAX reference (mirrors the PyTorch forward, 'add' path)
# ----------------------------------------------------------------------------
def single_attention_add_ref(x, Wt, Wx, bh, Wa, ba):
    hi = jax.lax.Precision.HIGHEST
    q = jnp.dot(x[:, -1, :], Wt, precision=hi)                      # (B, H)
    k = jnp.einsum('btd,dh->bth', x, Wx, precision=hi)              # (B, T, H)
    h = jnp.tanh(q[:, None, :] + k + bh[None, None, :])             # (B, T, H)
    e = jnp.einsum('bth,h->bt', h, Wa[:, 0], precision=hi) + ba[0]  # (B, T)
    a = jax.nn.softmax(e, axis=1)                                   # nn.Softmax() on 2-D -> dim 1
    v = jnp.einsum('bt,btd->bd', a, x, precision=hi)                # (B, D)
    return v, a


# ----------------------------------------------------------------------------
# Main
# ----------------------------------------------------------------------------
if __name__ == "__main__":
    B, T = 2, 8                     # batch, time steps
    D_IN, D_HID = 32, 16            # attention_input_dim, attention_hidden_dim

    key = jax.random.PRNGKey(0)
    kx, kwt, kwx, kwa = jax.random.split(key, 4)

    def kaiming_uniform(k, shape, fan_in):
        bound = 1.0 / math.sqrt(fan_in)
        return jax.random.uniform(k, shape, jnp.float32, -bound, bound)

    x = jax.random.normal(kx, (B, T, D_IN), dtype=jnp.float32)
    Wt = kaiming_uniform(kwt, (D_IN, D_HID), D_IN)
    Wx = kaiming_uniform(kwx, (D_IN, D_HID), D_IN)
    Wa = kaiming_uniform(kwa, (D_HID, 1), D_HID)
    bh = jnp.zeros((D_HID,), jnp.float32)
    ba = jnp.zeros((1,), jnp.float32)

    v, a = single_attention_add(x, Wt, Wx, bh, Wa, ba)
    v = jax.block_until_ready(v)
    a = jax.block_until_ready(a)

    v_ref, a_ref = single_attention_add_ref(x, Wt, Wx, bh, Wa, ba)

    assert v.shape == (B, D_IN) and a.shape == (B, T)
    # approx reciprocal + default MXU precision -> compare at relaxed tolerance
    assert jnp.allclose(jnp.sum(a, axis=-1), 1.0, atol=1e-2), "softmax not normalized"
    assert jnp.allclose(a, a_ref, atol=2e-2, rtol=2e-2), "attention weights mismatch"
    assert jnp.allclose(v, v_ref, atol=2e-2, rtol=2e-2), "context vector mismatch"

    print("KERNEL_OK")
</pallas_src>

<mosaic_0001>
module attributes {stable_mosaic.version = 11 : i64} {
  func.func @_attn_add_kernel(%arg0: i32, %arg1: memref<8x8x32xf32, #tpu.memory_space<vmem>>, %arg2: memref<32x16xf32, #tpu.memory_space<vmem>>, %arg3: memref<32x16xf32, #tpu.memory_space<vmem>>, %arg4: memref<1x16xf32, #tpu.memory_space<vmem>>, %arg5: memref<1x16xf32, #tpu.memory_space<vmem>>, %arg6: memref<8x32xf32, #tpu.memory_space<vmem>>, %arg7: memref<8x8xf32, #tpu.memory_space<vmem>>) attributes {dimension_semantics = [#tpu.dimension_semantics<parallel>], iteration_bounds = array<i64: 1>, scalar_prefetch = 0 : i64, scratch_operands = 0 : i64, tpu.core_type = #tpu.core_type<tc>, window_params = [{transform_indices = @transform_0, window_bounds = array<i64: 8, 8, 32>}, {pipeline_mode = #tpu.pipeline_mode<synchronous>, transform_indices = @transform_1, window_bounds = array<i64: 32, 16>}, {pipeline_mode = #tpu.pipeline_mode<synchronous>, transform_indices = @transform_2, window_bounds = array<i64: 32, 16>}, {pipeline_mode = #tpu.pipeline_mode<synchronous>, transform_indices = @transform_3, window_bounds = array<i64: 1, 16>}, {pipeline_mode = #tpu.pipeline_mode<synchronous>, transform_indices = @transform_4, window_bounds = array<i64: 1, 16>}, {transform_indices = @transform_5, window_bounds = array<i64: 8, 32>}, {transform_indices = @transform_6, window_bounds = array<i64: 8, 8>}]} {
    %c0 = arith.constant 0 : index
    %c0_0 = arith.constant 0 : index
    %c0_1 = arith.constant 0 : index
    %0 = vector.load %arg1[%c0, %c0_0, %c0_1] : memref<8x8x32xf32, #tpu.memory_space<vmem>>, vector<8x8x32xf32>
    %1 = vector.extract_strided_slice %0 {offsets = [0, 7, 0], sizes = [8, 1, 32], strides = [1, 1, 1]} : vector<8x8x32xf32> to vector<8x1x32xf32>
    %2 = vector.shape_cast %1 : vector<8x1x32xf32> to vector<8x32xf32>
    %c0_2 = arith.constant 0 : index
    %c0_3 = arith.constant 0 : index
    %3 = vector.load %arg2[%c0_2, %c0_3] : memref<32x16xf32, #tpu.memory_space<vmem>>, vector<32x16xf32>
    %cst = arith.constant dense<0.000000e+00> : vector<8x16xf32>
    %4 = tpu.matmul %2, %3, %cst {dimension_numbers = #tpu.dot_dimension_numbers<[1], [0], [0], [1], [0, 0, 1, 1], [], []>} : vector<8x32xf32>, vector<32x16xf32>, vector<8x16xf32> -> vector<8x16xf32>
    %5 = vector.shape_cast %0 : vector<8x8x32xf32> to vector<64x32xf32>
    %c0_4 = arith.constant 0 : index
    %c0_5 = arith.constant 0 : index
    %6 = vector.load %arg3[%c0_4, %c0_5] : memref<32x16xf32, #tpu.memory_space<vmem>>, vector<32x16xf32>
    %cst_6 = arith.constant dense<0.000000e+00> : vector<64x16xf32>
    %7 = tpu.matmul %5, %6, %cst_6 {dimension_numbers = #tpu.dot_dimension_numbers<[1], [0], [0], [1], [0, 0, 1, 1], [], []>} : vector<64x32xf32>, vector<32x16xf32>, vector<64x16xf32> -> vector<64x16xf32>
    %8 = vector.shape_cast %7 : vector<64x16xf32> to vector<8x8x16xf32>
    %9 = vector.shape_cast %4 : vector<8x16xf32> to vector<8x1x16xf32>
    %10 = vector.broadcast %9 : vector<8x1x16xf32> to vector<8x8x16xf32>
    %11 = arith.addf %8, %10 : vector<8x8x16xf32>
    %c0_7 = arith.constant 0 : index
    %c0_8 = arith.constant 0 : index
    %12 = vector.load %arg4[%c0_7, %c0_8] : memref<1x16xf32, #tpu.memory_space<vmem>>, vector<1x16xf32>
    %13 = vector.shape_cast %12 : vector<1x16xf32> to vector<1x1x16xf32>
    %14 = vector.broadcast %13 : vector<1x1x16xf32> to vector<8x8x16xf32>
    %15 = arith.addf %11, %14 : vector<8x8x16xf32>
    %16 = math.tanh %15 : vector<8x8x16xf32>
    %c0_9 = arith.constant 0 : index
    %c0_10 = arith.constant 0 : index
    %17 = vector.load %arg5[%c0_9, %c0_10] : memref<1x16xf32, #tpu.memory_space<vmem>>, vector<1x16xf32>
    %18 = vector.shape_cast %17 : vector<1x16xf32> to vector<1x1x16xf32>
    %19 = vector.broadcast %18 : vector<1x1x16xf32> to vector<8x8x16xf32>
    %20 = arith.mulf %16, %19 : vector<8x8x16xf32>
    %cst_11 = arith.constant dense<0.000000e+00> : vector<8x8xf32>
    %21 = vector.multi_reduction <add>, %20, %cst_11 [2] : vector<8x8x16xf32> to vector<8x8xf32>
    %cst_12 = arith.constant dense<0xFF800000> : vector<8xf32>
    %22 = vector.multi_reduction <maximumf>, %21, %cst_12 [1] : vector<8x8xf32> to vector<8xf32>
    %23 = vector.shape_cast %22 : vector<8xf32> to vector<8x1xf32>
    %24 = vector.broadcast %23 : vector<8x1xf32> to vector<8x8xf32>
    %25 = arith.subf %21, %24 : vector<8x8xf32>
    %26 = math.exp %25 : vector<8x8xf32>
    %cst_13 = arith.constant dense<0.000000e+00> : vector<8xf32>
    %27 = vector.multi_reduction <add>, %26, %cst_13 [1] : vector<8x8xf32> to vector<8xf32>
    %28 = vector.shape_cast %27 : vector<8xf32> to vector<8x1xf32>
    %29 = tpu.reciprocal %28 {approx = true} : vector<8x1xf32> -> vector<8x1xf32>
    %30 = vector.broadcast %29 : vector<8x1xf32> to vector<8x8xf32>
    %31 = arith.mulf %26, %30 : vector<8x8xf32>
    %32 = vector.shape_cast %31 : vector<8x8xf32> to vector<8x8x1xf32>
    %33 = vector.broadcast %32 : vector<8x8x1xf32> to vector<8x8x32xf32>
    %34 = arith.mulf %33, %0 : vector<8x8x32xf32>
    %cst_14 = arith.constant dense<0.000000e+00> : vector<8x32xf32>
    %35 = vector.multi_reduction <add>, %34, %cst_14 [1] : vector<8x8x32xf32> to vector<8x32xf32>
    %c0_15 = arith.constant 0 : index
    %c0_16 = arith.constant 0 : index
    %36 = vector.load %arg6[%c0_15, %c0_16] : memref<8x32xf32, #tpu.memory_space<vmem>>, vector<8x32xf32>
    tpu.vector_store %arg6[%c0_15, %c0_16], %35 {strides = array<i32>} : memref<8x32xf32, #tpu.memory_space<vmem>>, vector<8x32xf32>,
    %c0_17 = arith.constant 0 : index
    %c0_18 = arith.constant 0 : index
    %37 = vector.load %arg7[%c0_17, %c0_18] : memref<8x8xf32, #tpu.memory_space<vmem>>, vector<8x8xf32>
    tpu.vector_store %arg7[%c0_17, %c0_18], %31 {strides = array<i32>} : memref<8x8xf32, #tpu.memory_space<vmem>>, vector<8x8xf32>,
    return
  }
  func.func @transform_0(%arg0: i32) -> (i32, i32, i32) {
    %c0_i32 = arith.constant 0 : i32
    %c0_i32_0 = arith.constant 0 : i32
    %c0_i32_1 = arith.constant 0 : i32
    return %arg0, %c0_i32, %c0_i32_0 : i32, i32, i32
  }
  func.func @transform_1(%arg0: i32) -> (i32, i32) {
    %c0_i32 = arith.constant 0 : i32
    %c0_i32_0 = arith.constant 0 : i32
    %c0_i32_1 = arith.constant 0 : i32
    return %c0_i32, %c0_i32_0 : i32, i32
  }
  func.func @transform_2(%arg0: i32) -> (i32, i32) {
    %c0_i32 = arith.constant 0 : i32
    %c0_i32_0 = arith.constant 0 : i32
    %c0_i32_1 = arith.constant 0 : i32
    return %c0_i32, %c0_i32_0 : i32, i32
  }
  func.func @transform_3(%arg0: i32) -> (i32, i32) {
    %c0_i32 = arith.constant 0 : i32
    %c0_i32_0 = arith.constant 0 : i32
    %c0_i32_1 = arith.constant 0 : i32
    return %c0_i32, %c0_i32_0 : i32, i32
  }
  func.func @transform_4(%arg0: i32) -> (i32, i32) {
    %c0_i32 = arith.constant 0 : i32
    %c0_i32_0 = arith.constant 0 : i32
    %c0_i32_1 = arith.constant 0 : i32
    return %c0_i32, %c0_i32_0 : i32, i32
  }
  func.func @transform_5(%arg0: i32) -> (i32, i32) {
    %c0_i32 = arith.constant 0 : i32
    %c0_i32_0 = arith.constant 0 : i32
    return %arg0, %c0_i32 : i32, i32
  }
  func.func @transform_6(%arg0: i32) -> (i32, i32) {
    %c0_i32 = arith.constant 0 : i32
    %c0_i32_0 = arith.constant 0 : i32
    return %arg0, %c0_i32 : i32, i32
  }
}

</mosaic_0001>

<llo_original>
// kernel: tpu_custom_call.1
$region0: #{tpu_custom_call.1}
  #allocation0 [shape = 'u32[]', space=smem, size = 0x4, offset = 0x4, fixed_abs, tag = 'smem constant byte address 0x4 - core index']
  #allocation1 [shape = 'u32[72,128]{1,0:T(1,128)}', space=vmem, size = 0x9000, scoped, tag = 'internal scratch']
  %s0 = inlined_call_operand.vmem [shape: f32[8,8,32], index: 0, kind: input, shape index: {}]
  %s1 = inlined_call_operand.vmem [shape: f32[32,16], index: 1, kind: input, shape index: {}]
  %s2 = inlined_call_operand.vmem [shape: f32[32,16], index: 2, kind: input, shape index: {}]
  %s3 = inlined_call_operand.vmem [shape: f32[1,16], index: 3, kind: input, shape index: {}]
  %s4 = inlined_call_operand.vmem [shape: f32[1,16], index: 4, kind: input, shape index: {}]
  %s5 = inlined_call_operand.hbm [shape: f32[8,32], index: 5, kind: output, shape index: {0}]
  %s6 = inlined_call_operand.hbm [shape: f32[8,8], index: 6, kind: output, shape index: {1}]
  %7 = xla_tuple %s5, %s6
  %s8 = sld [smem:[#allocation0]]
  $region38: #{tpu_custom_call.1} parent=0
    _
  %s10 = ssub.s32 1, %s8
  %s11 = scalar_select 0, %s10, %s8
  $region1: #{tpu_custom_call.1} parent=0
    #allocation2 [shape = 'u8[4096]{0}', space=vmem, size = 0x1000, scoped, tag = 'output window, operand 0, single buffered']
    #allocation3 [shape = 's32[1]{0}', space=sflag, size = 0x4, scoped, tag = 'scoped memory for tpu_custom_call.1']
    #allocation4 [shape = 'u8[4096]{0}', space=vmem, size = 0x1000, scoped, tag = 'output window, operand 1, single buffered']
    #allocation5 [shape = 's32[1]{0}', space=sflag, size = 0x4, scoped, tag = 'scoped memory for tpu_custom_call.1']
    %12 = vsyncpa [#allocation3], 0
    %13 = vsyncpa [#allocation5], 0
    // Predicated region
    $region2: #{tpu_custom_call.1} parent=1 // pred_check
      _
    $region3: #{tpu_custom_call.1} parent=1 // pred_check_branch
      %15 = sbr.rel (0) target = $region5
    $region4: #{tpu_custom_call.1} parent=1 // pred_region
      _
    $region5: #{tpu_custom_call.1} parent=1 // pred_fallthru
      _
    // Predicated region
    $region6: #{tpu_custom_call.1} parent=1 // pred_check
      _
    $region7: #{tpu_custom_call.1} parent=1 // pred_check_branch
      %17 = sbr.rel (0) target = $region9
    $region8: #{tpu_custom_call.1} parent=1 // pred_region
      _
    $region9: #{tpu_custom_call.1} parent=1 // pred_fallthru
      _
    // Predicated region
    $region10: #{tpu_custom_call.1} parent=1 // pred_check
      _
    $region11: #{tpu_custom_call.1} parent=1 // pred_check_branch
      %19 = sbr.rel (0) target = $region13
    $region12: #{tpu_custom_call.1} parent=1 // pred_region
      _
    $region13: #{tpu_custom_call.1} parent=1 // pred_fallthru
      _
    // Predicated region
    $region14: #{tpu_custom_call.1} parent=1 // pred_check
      _
    $region15: #{tpu_custom_call.1} parent=1 // pred_check_branch
      %21 = sbr.rel (0) target = $region17
    $region16: #{tpu_custom_call.1} parent=1 // pred_region
      _
    $region17: #{tpu_custom_call.1} parent=1 // pred_fallthru
      _
    // Predicated region
    $region18: #{tpu_custom_call.1} parent=1 // pred_check
      _
    $region19: #{tpu_custom_call.1} parent=1 // pred_check_branch
      %23 = sbr.rel (0) target = $region21
    $region20: #{tpu_custom_call.1} parent=1 // pred_region
      _
    $region21: #{tpu_custom_call.1} parent=1 // pred_fallthru
      _
    %v24 = vld [vmem:[%s0] sm:$0xff]
    %v25 = vld [vmem:[%s0 + $0x8] sm:$0xff]
    %v26 = vld [vmem:[%s0 + $0x10] sm:$0xff]
    %v27 = vld [vmem:[%s0 + $0x18] sm:$0xff]
    %v28 = vld [vmem:[%s0 + $0x20] sm:$0xff]
    %v29 = vld [vmem:[%s0 + $0x28] sm:$0xff]
    %v30 = vld [vmem:[%s0 + $0x30] sm:$0xff]
    %v31 = vld [vmem:[%s0 + $0x38] sm:$0xff]
    %v32 = vld [vmem:[%s1] sm:$0xff]
    %v33 = vld [vmem:[%s1 + $0x8] sm:$0xff]
    %v34 = vld [vmem:[%s1 + $0x10] sm:$0xff]
    %v35 = vld [vmem:[%s1 + $0x18] sm:$0xff]
    %v44 = vrot.slane %v24, 7
    %v45 = vrot.slane %v25, 6
    %vm46 = vcmask 1041409
    %v47 = vsel %vm46, %v45, %v44
    %v48 = vrot.slane %v26, 5
    %vm49 = vcmask 1042434
    %v50 = vsel %vm49, %v48, %v47
    %v51 = vrot.slane %v27, 4
    %vm52 = vcmask 1043459
    %v53 = vsel %vm52, %v51, %v50
    %v54 = vrot.slane %v28, 3
    %vm55 = vcmask 1044484
    %v56 = vsel %vm55, %v54, %v53
    %v57 = vrot.slane %v29, 2
    %vm58 = vcmask 1045509
    %v59 = vsel %vm58, %v57, %v56
    %v60 = vrot.slane %v30, 1
    %vm61 = vcmask 1046534
    %v62 = vsel %vm61, %v60, %v59
    %vm63 = vcmask 1047559
    %v64 = vsel %vm63, %v31, %v62
    %vm65 = vcmask 261120
    %v66 = vsel %vm65, %v64, 0
    %68 = vmatpush.msra.mxu0 0.0
    %69 = vmatpush.msra.mxu0 0.0
    %70 = vmatpush.msra.mxu0 0.0
    %71 = vmatpush.msra.mxu0 0.0
    %72 = vmatpush.msra.mxu0 0.0
    %73 = vmatpush.msra.mxu0 0.0
    %74 = vmatpush.msra.mxu0 0.0
    %75 = vmatpush.msra.mxu0 0.0
    %76 = vmatpush.msra.mxu0 0.0
    %77 = vmatpush.msra.mxu0 0.0
    %78 = vmatpush.msra.mxu0 0.0
    %79 = vmatpush.msra.mxu0 0.0
    %80 = vmatpush.msra.mxu0 %v35
    %81 = vmatpush.msra.mxu0 %v34
    %82 = vmatpush.msra.mxu0 %v33
    %83 = vmatpush.msra.mxu0 %v32
    %84 = vmatmul.f32.gmra.mxu0 %v66
    %v85 = vpop.f32.mrf.mxu0
    %v86 = vadd.f32 0.0, %v85
    %87 = vdwg.mxu0
    %v88 = vld [vmem:[%s2] sm:$0xff]
    %v89 = vld [vmem:[%s2 + $0x8] sm:$0xff]
    %v90 = vld [vmem:[%s2 + $0x10] sm:$0xff]
    %v91 = vld [vmem:[%s2 + $0x18] sm:$0xff]
    %v92 = vsel %vm65, %v24, 0
    %v94 = vsel %vm65, %v25, 0
    %v96 = vsel %vm65, %v26, 0
    %v98 = vsel %vm65, %v27, 0
    %v100 = vsel %vm65, %v28, 0
    %v102 = vsel %vm65, %v29, 0
    %v104 = vsel %vm65, %v30, 0
    %v106 = vsel %vm65, %v31, 0
    %108 = vmatpush.msra.mxu0 0.0
    %109 = vmatpush.msra.mxu0 0.0
    %110 = vmatpush.msra.mxu0 0.0
    %111 = vmatpush.msra.mxu0 0.0
    %112 = vmatpush.msra.mxu0 0.0
    %113 = vmatpush.msra.mxu0 0.0
    %114 = vmatpush.msra.mxu0 0.0
    %115 = vmatpush.msra.mxu0 0.0
    %116 = vmatpush.msra.mxu0 0.0
    %117 = vmatpush.msra.mxu0 0.0
    %118 = vmatpush.msra.mxu0 0.0
    %119 = vmatpush.msra.mxu0 0.0
    %120 = vmatpush.msra.mxu0 %v91
    %121 = vmatpush.msra.mxu0 %v90
    %122 = vmatpush.msra.mxu0 %v89
    %123 = vmatpush.msra.mxu0 %v88
    %124 = vmatmul.f32.gmra.mxu0 %v92
    %v125 = vpop.f32.mrf.mxu0
    %v126 = vadd.f32 0.0, %v125
    %127 = vmatmul.f32.gmra.mxu0 %v94
    %v128 = vpop.f32.mrf.mxu0
    %v129 = vadd.f32 0.0, %v128
    %130 = vmatmul.f32.gmra.mxu0 %v96
    %v131 = vpop.f32.mrf.mxu0
    %v132 = vadd.f32 0.0, %v131
    %133 = vmatmul.f32.gmra.mxu0 %v98
    %v134 = vpop.f32.mrf.mxu0
    %v135 = vadd.f32 0.0, %v134
    %136 = vmatmul.f32.gmra.mxu0 %v100
    %v137 = vpop.f32.mrf.mxu0
    %v138 = vadd.f32 0.0, %v137
    %139 = vmatmul.f32.gmra.mxu0 %v102
    %v140 = vpop.f32.mrf.mxu0
    %v141 = vadd.f32 0.0, %v140
    %142 = vmatmul.f32.gmra.mxu0 %v104
    %v143 = vpop.f32.mrf.mxu0
    %v144 = vadd.f32 0.0, %v143
    %145 = vmatmul.f32.gmra.mxu0 %v106
    %v146 = vpop.f32.mrf.mxu0
    %v147 = vadd.f32 0.0, %v146
    %148 = vdwg.mxu0
    %v150 = vrot.slane %v86, 1
    %v151 = vrot.slane %v86, 2
    %v152 = vrot.slane %v86, 3
    %v153 = vrot.slane %v86, 4
    %v154 = vrot.slane %v86, 5
    %v155 = vrot.slane %v86, 6
    %v156 = vrot.slane %v86, 7
    %v157 = vperm.slane %v86, 0
    %v158 = vperm.slane %v150, 0
    %v159 = vperm.slane %v151, 0
    %v160 = vperm.slane %v152, 0
    %v161 = vperm.slane %v153, 0
    %v162 = vperm.slane %v154, 0
    %v163 = vperm.slane %v155, 0
    %v164 = vperm.slane %v156, 0
    %v173 = vadd.f32 %v126, %v157
    %v174 = vadd.f32 %v129, %v158
    %v175 = vadd.f32 %v132, %v159
    %v176 = vadd.f32 %v135, %v160
    %v177 = vadd.f32 %v138, %v161
    %v178 = vadd.f32 %v141, %v162
    %v179 = vadd.f32 %v144, %v163
    %v180 = vadd.f32 %v147, %v164
    %v181 = vld [vmem:[%s3] sm:$0x1]
    %v183 = vperm.slane %v181, 0
    %v185 = vadd.f32 %v173, %v183
    %v186 = vadd.f32 %v174, %v183
    %v187 = vadd.f32 %v175, %v183
    %v188 = vadd.f32 %v176, %v183
    %v189 = vadd.f32 %v177, %v183
    %v190 = vadd.f32 %v178, %v183
    %v191 = vadd.f32 %v179, %v183
    %v192 = vadd.f32 %v180, %v183
    %v193 = vtanh.pop %v185
    %v194 = vtanh.pop %v186
    %v195 = vtanh.pop %v187
    %v196 = vtanh.pop %v188
    %v197 = vtanh.pop %v189
    %v198 = vtanh.pop %v190
    %v199 = vtanh.pop %v191
    %v200 = vtanh.pop %v192
    %v201 = vld [vmem:[%s4] sm:$0x1]
    %v203 = vperm.slane %v201, 0
    %v205 = vmul.f32 %v193, %v203
    %v206 = vmul.f32 %v194, %v203
    %v207 = vmul.f32 %v195, %v203
    %v208 = vmul.f32 %v196, %v203
    %v209 = vmul.f32 %v197, %v203
    %v210 = vmul.f32 %v198, %v203
    %v211 = vmul.f32 %v199, %v203
    %v212 = vmul.f32 %v200, %v203
    %vm213 = vcmask 130048
    %v214 = vsel %vm213, %v205, 0.0
    %215 = vadd.xlane.f32.xlu0 %v214
    %v216 = vpop.xlane.xlu0 %215
    %v217 = vsel %vm213, %v206, 0.0
    %218 = vadd.xlane.f32.xlu0 %v217
    %v219 = vpop.xlane.xlu0 %218
    %v220 = vsel %vm213, %v207, 0.0
    %221 = vadd.xlane.f32.xlu0 %v220
    %v222 = vpop.xlane.xlu0 %221
    %v223 = vsel %vm213, %v208, 0.0
    %224 = vadd.xlane.f32.xlu0 %v223
    %v225 = vpop.xlane.xlu0 %224
    %v226 = vsel %vm213, %v209, 0.0
    %227 = vadd.xlane.f32.xlu0 %v226
    %v228 = vpop.xlane.xlu0 %227
    %v229 = vsel %vm213, %v210, 0.0
    %230 = vadd.xlane.f32.xlu0 %v229
    %v231 = vpop.xlane.xlu0 %230
    %v232 = vsel %vm213, %v211, 0.0
    %233 = vadd.xlane.f32.xlu0 %v232
    %v234 = vpop.xlane.xlu0 %233
    %v235 = vsel %vm213, %v212, 0.0
    %236 = vadd.xlane.f32.xlu0 %v235
    %v237 = vpop.xlane.xlu0 %236
    %v246 = vlaneseq
    %v247 = vand.u32 %v246, 127
    %v248 = vperm.slane %v216, %v247
    %v249 = vperm.slane %v219, %v247
    %v250 = vperm.slane %v222, %v247
    %v251 = vperm.slane %v225, %v247
    %v252 = vperm.slane %v228, %v247
    %v253 = vperm.slane %v231, %v247
    %v254 = vperm.slane %v234, %v247
    %v255 = vperm.slane %v237, %v247
    %v256 = vsel %vm46, %v249, %v248
    %v257 = vsel %vm49, %v250, %v256
    %v258 = vsel %vm52, %v251, %v257
    %v259 = vsel %vm55, %v252, %v258
    %v260 = vsel %vm58, %v253, %v259
    %v261 = vsel %vm61, %v254, %v260
    %v262 = vsel %vm63, %v255, %v261
    %vm264 = vcmask 64512
    %v265 = vsel %vm264, %v262, -inf
    %266 = vmax.xlane.f32.xlu0 %v265
    %v267 = vpop.xlane.xlu0 %266
    %v269 = vperm.slane %v267, 0
    %v270 = vperm.slane %v267, 1
    %v271 = vperm.slane %v267, 2
    %v272 = vperm.slane %v267, 3
    %v273 = vperm.slane %v267, 4
    %v274 = vperm.slane %v267, 5
    %v275 = vperm.slane %v267, 6
    %v276 = vperm.slane %v267, 7
    %v285 = vsub.f32 %v216, %v269
    %v286 = vsub.f32 %v219, %v270
    %v287 = vsub.f32 %v222, %v271
    %v288 = vsub.f32 %v225, %v272
    %v289 = vsub.f32 %v228, %v273
    %v290 = vsub.f32 %v231, %v274
    %v291 = vsub.f32 %v234, %v275
    %v292 = vsub.f32 %v237, %v276
    %v293 = vmul.f32 %v285, 1.442695
    %v294 = vpow.pop %v293
    %v295 = vmul.f32 %v286, 1.442695
    %v296 = vpow.pop %v295
    %v297 = vmul.f32 %v287, 1.442695
    %v298 = vpow.pop %v297
    %v299 = vmul.f32 %v288, 1.442695
    %v300 = vpow.pop %v299
    %v301 = vmul.f32 %v289, 1.442695
    %v302 = vpow.pop %v301
    %v303 = vmul.f32 %v290, 1.442695
    %v304 = vpow.pop %v303
    %v305 = vmul.f32 %v291, 1.442695
    %v306 = vpow.pop %v305
    %v307 = vmul.f32 %v292, 1.442695
    %v308 = vpow.pop %v307
    %317 = vset.pattern.permute.xlu0 0
    %318 = vperm.xlu0 %317, %v294
    %v319 = vpop.permute.xlu0 %318
    %320 = vset.pattern.permute.xlu0 0
    %321 = vperm.xlu0 %320, %v296
    %v322 = vpop.permute.xlu0 %321
    %323 = vset.pattern.permute.xlu0 0
    %324 = vperm.xlu0 %323, %v298
    %v325 = vpop.permute.xlu0 %324
    %326 = vset.pattern.permute.xlu0 0
    %327 = vperm.xlu0 %326, %v300
    %v328 = vpop.permute.xlu0 %327
    %329 = vset.pattern.permute.xlu0 0
    %330 = vperm.xlu0 %329, %v302
    %v331 = vpop.permute.xlu0 %330
    %332 = vset.pattern.permute.xlu0 0
    %333 = vperm.xlu0 %332, %v304
    %v334 = vpop.permute.xlu0 %333
    %335 = vset.pattern.permute.xlu0 0
    %336 = vperm.xlu0 %335, %v306
    %v337 = vpop.permute.xlu0 %336
    %338 = vset.pattern.permute.xlu0 0
    %339 = vperm.xlu0 %338, %v308
    %v340 = vpop.permute.xlu0 %339
    %v341 = vperm.slane %v319, %v247
    %v342 = vperm.slane %v322, %v247
    %v343 = vperm.slane %v325, %v247
    %v344 = vperm.slane %v328, %v247
    %v345 = vperm.slane %v331, %v247
    %v346 = vperm.slane %v334, %v247
    %v347 = vperm.slane %v337, %v247
    %v348 = vperm.slane %v340, %v247
    %v349 = vsel %vm46, %v342, %v341
    %v350 = vsel %vm49, %v343, %v349
    %v351 = vsel %vm52, %v344, %v350
    %v352 = vsel %vm55, %v345, %v351
    %v353 = vsel %vm58, %v346, %v352
    %v354 = vsel %vm61, %v347, %v353
    %v355 = vsel %vm63, %v348, %v354
    %v357 = vsel %vm264, %v355, 0.0
    %358 = vadd.xlane.f32.xlu0 %v357
    %v359 = vpop.xlane.xlu0 %358
    %v360 = vrcp.pop %v359
    %v362 = vperm.slane %v360, 0
    %v363 = vperm.slane %v360, 1
    %v364 = vperm.slane %v360, 2
    %v365 = vperm.slane %v360, 3
    %v366 = vperm.slane %v360, 4
    %v367 = vperm.slane %v360, 5
    %v368 = vperm.slane %v360, 6
    %v369 = vperm.slane %v360, 7
    %v378 = vmul.f32 %v294, %v362
    %v379 = vmul.f32 %v296, %v363
    %v380 = vmul.f32 %v298, %v364
    %v381 = vmul.f32 %v300, %v365
    %v382 = vmul.f32 %v302, %v366
    %v383 = vmul.f32 %v304, %v367
    %v384 = vmul.f32 %v306, %v368
    %v385 = vmul.f32 %v308, %v369
    %387 = vset.pattern.permute.xlu0 0
    %388 = vperm.xlu0 %387, %v378
    %v389 = vpop.permute.xlu0 %388
    %392 = vset.pattern.permute.xlu0 0
    %393 = vperm.xlu0 %392, %v379
    %v394 = vpop.permute.xlu0 %393
    %397 = vset.pattern.permute.xlu0 0
    %398 = vperm.xlu0 %397, %v380
    %v399 = vpop.permute.xlu0 %398
    %402 = vset.pattern.permute.xlu0 0
    %403 = vperm.xlu0 %402, %v381
    %v404 = vpop.permute.xlu0 %403
    %407 = vset.pattern.permute.xlu0 0
    %408 = vperm.xlu0 %407, %v382
    %v409 = vpop.permute.xlu0 %408
    %412 = vset.pattern.permute.xlu0 0
    %413 = vperm.xlu0 %412, %v383
    %v414 = vpop.permute.xlu0 %413
    %417 = vset.pattern.permute.xlu0 0
    %418 = vperm.xlu0 %417, %v384
    %v419 = vpop.permute.xlu0 %418
    %422 = vset.pattern.permute.xlu0 0
    %423 = vperm.xlu0 %422, %v385
    %v424 = vpop.permute.xlu0 %423
    %v426 = vmul.f32 %v389, %v24
    %v427 = vmul.f32 %v394, %v25
    %v428 = vmul.f32 %v399, %v26
    %v429 = vmul.f32 %v404, %v27
    %v430 = vmul.f32 %v409, %v28
    %v431 = vmul.f32 %v414, %v29
    %v432 = vmul.f32 %v419, %v30
    %v433 = vmul.f32 %v424, %v31
    %v434 = vsel %vm65, %v426, 0.0
    %v435 = vrot.slane %v434, 4
    %v436 = vadd.f32 %v434, %v435
    %v437 = vrot.slane %v436, 2
    %v438 = vadd.f32 %v436, %v437
    %v439 = vrot.slane %v438, 1
    %v440 = vadd.f32 %v438, %v439
    %v441 = vsel %vm65, %v427, 0.0
    %v442 = vrot.slane %v441, 4
    %v443 = vadd.f32 %v441, %v442
    %v444 = vrot.slane %v443, 2
    %v445 = vadd.f32 %v443, %v444
    %v446 = vrot.slane %v445, 1
    %v447 = vadd.f32 %v445, %v446
    %v448 = vsel %vm65, %v428, 0.0
    %v449 = vrot.slane %v448, 4
    %v450 = vadd.f32 %v448, %v449
    %v451 = vrot.slane %v450, 2
    %v452 = vadd.f32 %v450, %v451
    %v453 = vrot.slane %v452, 1
    %v454 = vadd.f32 %v452, %v453
    %v455 = vsel %vm65, %v429, 0.0
    %v456 = vrot.slane %v455, 4
    %v457 = vadd.f32 %v455, %v456
    %v458 = vrot.slane %v457, 2
    %v459 = vadd.f32 %v457, %v458
    %v460 = vrot.slane %v459, 1
    %v461 = vadd.f32 %v459, %v460
    %v462 = vsel %vm65, %v430, 0.0
    %v463 = vrot.slane %v462, 4
    %v464 = vadd.f32 %v462, %v463
    %v465 = vrot.slane %v464, 2
    %v466 = vadd.f32 %v464, %v465
    %v467 = vrot.slane %v466, 1
    %v468 = vadd.f32 %v466, %v467
    %v469 = vsel %vm65, %v431, 0.0
    %v470 = vrot.slane %v469, 4
    %v471 = vadd.f32 %v469, %v470
    %v472 = vrot.slane %v471, 2
    %v473 = vadd.f32 %v471, %v472
    %v474 = vrot.slane %v473, 1
    %v475 = vadd.f32 %v473, %v474
    %v476 = vsel %vm65, %v432, 0.0
    %v477 = vrot.slane %v476, 4
    %v478 = vadd.f32 %v476, %v477
    %v479 = vrot.slane %v478, 2
    %v480 = vadd.f32 %v478, %v479
    %v481 = vrot.slane %v480, 1
    %v482 = vadd.f32 %v480, %v481
    %v483 = vsel %vm65, %v433, 0.0
    %v484 = vrot.slane %v483, 4
    %v485 = vadd.f32 %v483, %v484
    %v486 = vrot.slane %v485, 2
    %v487 = vadd.f32 %v485, %v486
    %v488 = vrot.slane %v487, 1
    %v489 = vadd.f32 %v487, %v488
    %v498 = vsel %vm46, %v447, %v440
    %v499 = vsel %vm49, %v454, %v498
    %v500 = vsel %vm52, %v461, %v499
    %v501 = vsel %vm55, %v468, %v500
    %v502 = vsel %vm58, %v475, %v501
    %v503 = vsel %vm61, %v482, %v502
    %v504 = vsel %vm63, %v489, %v503
    %506 = vst.msk [vmem:[#allocation2] sm:$0xff] %vm65, %v504
    %v507 = vperm.slane %v389, %v247
    %v508 = vperm.slane %v394, %v247
    %v509 = vperm.slane %v399, %v247
    %v510 = vperm.slane %v404, %v247
    %v511 = vperm.slane %v409, %v247
    %v512 = vperm.slane %v414, %v247
    %v513 = vperm.slane %v419, %v247
    %v514 = vperm.slane %v424, %v247
    %v515 = vsel %vm46, %v508, %v507
    %v516 = vsel %vm49, %v509, %v515
    %v517 = vsel %vm52, %v510, %v516
    %v518 = vsel %vm55, %v511, %v517
    %v519 = vsel %vm58, %v512, %v518
    %v520 = vsel %vm61, %v513, %v519
    %v521 = vsel %vm63, %v514, %v520
    %523 = vst.msk [vmem:[#allocation4] sm:$0xff] %vm264, %v521
    // Predicated region
    $region22: #{tpu_custom_call.1} parent=1 // pred_check
      _
    $region23: #{tpu_custom_call.1} parent=1 // pred_check_branch
      %525 = sbr.rel (0) target = $region25
    $region24: #{tpu_custom_call.1} parent=1 // pred_region
      %527 = vsyncadd [#allocation3], 0
      %s529 = sshll.u32 [#allocation2], 4
      %s530 = int_to_ptr.vmem [resolvable:$true] %s529
      %s531 = sshll.u32 %s5, 4
      %s532 = int_to_ptr.hbm [resolvable:$true] %s531
      %534 = dma.vmem_to_hbm [thread:$0]  %s530, 128, %s532, [#allocation3]
    $region25: #{tpu_custom_call.1} parent=1 // pred_fallthru
      _
    // Predicated region
    $region26: #{tpu_custom_call.1} parent=1 // pred_check
      _
    $region27: #{tpu_custom_call.1} parent=1 // pred_check_branch
      %536 = sbr.rel (0) target = $region29
    $region28: #{tpu_custom_call.1} parent=1 // pred_region
      %538 = vsyncadd [#allocation5], 0
      %s540 = sshll.u32 [#allocation4], 4
      %s541 = int_to_ptr.vmem [resolvable:$true] %s540
      %s542 = sshll.u32 %s6, 4
      %s543 = int_to_ptr.hbm [resolvable:$true] %s542
      %545 = dma.vmem_to_hbm [thread:$0]  %s541, 128, %s543, [#allocation5]
    $region29: #{tpu_custom_call.1} parent=1 // pred_fallthru
      _
    // Predicated region
    $region30: #{tpu_custom_call.1} parent=1 // pred_check
      _
    $region31: #{tpu_custom_call.1} parent=1 // pred_check_branch
      %547 = sbr.rel (0) target = $region33
    $region32: #{tpu_custom_call.1} parent=1 // pred_region
      %549 = dma.done [#allocation3], 128
    $region33: #{tpu_custom_call.1} parent=1 // pred_fallthru
      _
    // Predicated region
    $region34: #{tpu_custom_call.1} parent=1 // pred_check
      _
    $region35: #{tpu_custom_call.1} parent=1 // pred_check_branch
      %551 = sbr.rel (0) target = $region37
    $region36: #{tpu_custom_call.1} parent=1 // pred_region
      %553 = dma.done [#allocation5], 128
    $region37: #{tpu_custom_call.1} parent=1 // pred_fallthru
      _
    %554 = vsyncpa [#allocation3], 1
    %555 = vsyncpa [#allocation5], 1

</llo_original>
